<compile_context>
chip_gen: v7x
topology: tpu7x:2x2x1
jax: 0.10.0
libtpu: 0.0.40
codegen_flags: <defaults>
</compile_context>

<pallas_src>
import math
import jax
import jax.numpy as jnp
from jax import lax
from jax.experimental import pallas as pl
from jax.experimental.pallas import tpu as pltpu

# ---------------- hyper-parameters (match the PyTorch module defaults) ----------
DIM = 32              # embedding dim
CN = 8                # number of classes
K = 2                 # sub-centers per class
LA = 20.0
GAMMA = 1.0 / 0.1     # self.gamma = 1/gamma
TAU = 0.2
MARGIN = 0.01
B = 8                 # batch size


def soft_triple_kernel(x_ref, fc_ref, tgt_ref, out_ref):
    x = x_ref[...]            # (B, DIM)
    w = fc_ref[...]           # (DIM, K*CN), sub-center-major columns

    # --- F.normalize(fc, p=2, dim=0): one axis-0 reduce + rsqrt + multiply ------
    sq = jnp.sum(w * w, axis=0, keepdims=True)               # (1, K*CN)
    cent = w * lax.rsqrt(jnp.maximum(sq, 1e-24))              # (DIM, K*CN)

    # --- single fused matmul on the MXU ----------------------------------------
    sim = jnp.dot(x, cent, preferred_element_type=jnp.float32)   # (B, K*CN)
    s = [sim[:, k * CN:(k + 1) * CN] for k in range(K)]          # K x (B, CN)

    # --- softmax over K, then simClass ------------------------------------------
    if K == 2:
        # 2-way softmax == sigmoid of the scaled difference (single exp).
        p0 = 1.0 / (1.0 + jnp.exp(-GAMMA * (s[0] - s[1])))
        sim_class = p0 * s[0] + (1.0 - p0) * s[1]                # (B, CN)
    else:
        m = s[0]
        for k in range(1, K):
            m = jnp.maximum(m, s[k])
        e = [jnp.exp(GAMMA * (sk - m)) for sk in s]
        denom = e[0]
        for k in range(1, K):
            denom = denom + e[k]
        inv_denom = pl.reciprocal(denom, approx=True)
        sim_class = e[0] * inv_denom * s[0]
        for k in range(1, K):
            sim_class = sim_class + e[k] * inv_denom * s[k]

    # --- one-hot built in-kernel (iota compare) ----------------------------------
    tgt = tgt_ref[...]                                          # (B, 1) int32
    col = lax.broadcasted_iota(jnp.int32, (B, CN), 1)           # (B, CN)
    oh = col == tgt                                             # bool (B, CN)

    # --- margin + cross-entropy (mean reduction) ---------------------------------
    logits = LA * jnp.where(oh, sim_class - MARGIN, sim_class)  # (B, CN)
    lmax = jnp.max(logits, axis=1, keepdims=True)               # (B, 1)
    lse = jnp.log(jnp.sum(jnp.exp(logits - lmax), axis=1, keepdims=True)) + lmax
    tgt_logit = jnp.sum(jnp.where(oh, logits, 0.0), axis=1, keepdims=True)
    loss_cls = jnp.sum(lse - tgt_logit, axis=0, keepdims=True) * (1.0 / B)   # (1,1)

    # --- regularizer over within-class sub-center pairs (k1 < k2) -----------------
    reg = jnp.zeros((1, 1), dtype=jnp.float32)
    for k1 in range(K):
        c1 = cent[:, k1 * CN:(k1 + 1) * CN]
        for k2 in range(k1 + 1, K):
            c2 = cent[:, k2 * CN:(k2 + 1) * CN]
            d = jnp.sum(c1 * c2, axis=0, keepdims=True)                     # (1, CN)
            reg = reg + jnp.sum(
                jnp.sqrt(jnp.maximum(2.0 + 1e-05 - 2.0 * d, 0.0)),
                axis=1, keepdims=True)                                      # (1, 1)
    reg = reg * (1.0 / (CN * K * (K - 1.0)))

    out_ref[...] = loss_cls + TAU * reg


def soft_triple_loss(x, fc, target):
    """x: (B, DIM) f32, fc: (DIM, CN*K) f32, target: (B,) int32 -> scalar loss."""
    # Permute weight columns to sub-center-major order so the kernel keeps a single
    # 2-D (DIM, K*CN) tile and per-sub-center views are contiguous lane slices.
    fc_p = fc.reshape(DIM, CN, K).transpose(0, 2, 1).reshape(DIM, K * CN)
    tgt2d = target.astype(jnp.int32).reshape(B, 1)

    out = pl.pallas_call(
        soft_triple_kernel,
        out_shape=jax.ShapeDtypeStruct((1, 1), jnp.float32),
        in_specs=[
            pl.BlockSpec(memory_space=pltpu.MemorySpace.VMEM),  # x
            pl.BlockSpec(memory_space=pltpu.MemorySpace.VMEM),  # fc (permuted)
            pl.BlockSpec(memory_space=pltpu.MemorySpace.VMEM),  # target (B,1) int32
        ],
        out_specs=pl.BlockSpec(memory_space=pltpu.MemorySpace.VMEM),
    )(x, fc_p, tgt2d)
    return out[0, 0]


def soft_triple_loss_ref(x, fc, target):
    """Pure-JAX reference of the PyTorch forward."""
    centers = fc / jnp.maximum(jnp.linalg.norm(fc, axis=0, keepdims=True), 1e-12)
    sim_ind = x @ centers
    sim_struc = sim_ind.reshape(-1, CN, K)
    prob = jax.nn.softmax(sim_struc * GAMMA, axis=2)
    sim_class = jnp.sum(prob * sim_struc, axis=2)
    margin_m = MARGIN * jax.nn.one_hot(target, CN, dtype=jnp.float32)
    logits = LA * (sim_class - margin_m)
    log_probs = jax.nn.log_softmax(logits, axis=1)
    loss_cls = -jnp.mean(log_probs[jnp.arange(x.shape[0]), target])
    sim_center = centers.T @ centers
    mask = jnp.zeros((CN * K, CN * K), dtype=bool)
    for i in range(CN):
        for j in range(K):
            mask = mask.at[i * K + j, i * K + j + 1:(i + 1) * K].set(True)
    reg = jnp.sum(jnp.where(mask, jnp.sqrt(2.0 + 1e-05 - 2.0 * sim_center), 0.0))
    reg = reg / (CN * K * (K - 1.0))
    return loss_cls + TAU * reg


if __name__ == "__main__":
    key = jax.random.PRNGKey(0)
    kx, kt, kw = jax.random.split(key, 3)

    x = jax.random.normal(kx, (B, DIM), dtype=jnp.float32)
    target = jax.random.randint(kt, (B,), 0, CN, dtype=jnp.int32)

    # deterministic kaiming_uniform_(a=sqrt(5)) style init: U(-1/sqrt(fan_in), 1/sqrt(fan_in))
    fan_in = CN * K
    bound = math.sqrt(6.0 / ((1.0 + 5.0) * fan_in))
    fc = jax.random.uniform(kw, (DIM, CN * K), dtype=jnp.float32,
                            minval=-bound, maxval=bound)

    loss = jax.block_until_ready(soft_triple_loss(x, fc, target))
    loss_ref = jax.block_until_ready(soft_triple_loss_ref(x, fc, target))

    assert jnp.allclose(loss, loss_ref, rtol=1e-5, atol=1e-5), (loss, loss_ref)
    print("KERNEL_OK")
</pallas_src>

<mosaic_0001>
module attributes {stable_mosaic.version = 11 : i64} {
  func.func @soft_triple_kernel(%arg0: memref<8x32xf32, #tpu.memory_space<vmem>>, %arg1: memref<32x16xf32, #tpu.memory_space<vmem>>, %arg2: memref<8x1xi32, #tpu.memory_space<vmem>>, %arg3: memref<1x1xf32, #tpu.memory_space<vmem>>) attributes {dimension_semantics = [], scalar_prefetch = 0 : i64, scratch_operands = 0 : i64, tpu.core_type = #tpu.core_type<tc>} {
    %c0 = arith.constant 0 : index
    %c0_0 = arith.constant 0 : index
    %0 = vector.load %arg0[%c0, %c0_0] : memref<8x32xf32, #tpu.memory_space<vmem>>, vector<8x32xf32>
    %c0_1 = arith.constant 0 : index
    %c0_2 = arith.constant 0 : index
    %1 = vector.load %arg1[%c0_1, %c0_2] : memref<32x16xf32, #tpu.memory_space<vmem>>, vector<32x16xf32>
    %2 = arith.mulf %1, %1 : vector<32x16xf32>
    %cst = arith.constant dense<0.000000e+00> : vector<16xf32>
    %3 = vector.multi_reduction <add>, %2, %cst [0] : vector<32x16xf32> to vector<16xf32>
    %4 = vector.shape_cast %3 : vector<16xf32> to vector<1x16xf32>
    %cst_3 = arith.constant 1.000000e-24 : f32
    %5 = vector.broadcast %cst_3 : f32 to vector<1x16xf32>
    %6 = arith.maximumf %4, %5 : vector<1x16xf32>
    %7 = math.rsqrt %6 : vector<1x16xf32>
    %8 = vector.broadcast %7 : vector<1x16xf32> to vector<32x16xf32>
    %9 = arith.mulf %1, %8 : vector<32x16xf32>
    %cst_4 = arith.constant dense<0.000000e+00> : vector<8x16xf32>
    %10 = tpu.matmul %0, %9, %cst_4 {dimension_numbers = #tpu.dot_dimension_numbers<[1], [0], [0], [1], [0, 0, 1, 1], [], []>} : vector<8x32xf32>, vector<32x16xf32>, vector<8x16xf32> -> vector<8x16xf32>
    %11 = vector.extract_strided_slice %10 {offsets = [0, 0], sizes = [8, 8], strides = [1, 1]} : vector<8x16xf32> to vector<8x8xf32>
    %12 = vector.extract_strided_slice %10 {offsets = [0, 8], sizes = [8, 8], strides = [1, 1]} : vector<8x16xf32> to vector<8x8xf32>
    %13 = arith.subf %11, %12 : vector<8x8xf32>
    %cst_5 = arith.constant -1.000000e+01 : f32
    %14 = vector.broadcast %cst_5 : f32 to vector<8x8xf32>
    %15 = arith.mulf %14, %13 : vector<8x8xf32>
    %16 = math.exp %15 : vector<8x8xf32>
    %cst_6 = arith.constant 1.000000e+00 : f32
    %17 = vector.broadcast %cst_6 : f32 to vector<8x8xf32>
    %18 = arith.addf %17, %16 : vector<8x8xf32>
    %cst_7 = arith.constant 1.000000e+00 : f32
    %19 = vector.broadcast %cst_7 : f32 to vector<8x8xf32>
    %20 = arith.divf %19, %18 : vector<8x8xf32>
    %21 = arith.mulf %20, %11 : vector<8x8xf32>
    %cst_8 = arith.constant 1.000000e+00 : f32
    %22 = vector.broadcast %cst_8 : f32 to vector<8x8xf32>
    %23 = arith.subf %22, %20 : vector<8x8xf32>
    %24 = arith.mulf %23, %12 : vector<8x8xf32>
    %25 = arith.addf %21, %24 : vector<8x8xf32>
    %c0_9 = arith.constant 0 : index
    %c0_10 = arith.constant 0 : index
    %26 = vector.load %arg2[%c0_9, %c0_10] : memref<8x1xi32, #tpu.memory_space<vmem>>, vector<8x1xi32>
    %27 = tpu.iota {dimensions = array<i32: 1>} : vector<8x8xi32>
    %28 = vector.broadcast %26 : vector<8x1xi32> to vector<8x8xi32>
    %29 = arith.cmpi eq, %27, %28 : vector<8x8xi32>
    %cst_11 = arith.constant 0.00999999977 : f32
    %30 = vector.broadcast %cst_11 : f32 to vector<8x8xf32>
    %31 = arith.subf %25, %30 : vector<8x8xf32>
    %32 = arith.select %29, %31, %25 : vector<8x8xi1>, vector<8x8xf32>
    %cst_12 = arith.constant 2.000000e+01 : f32
    %33 = vector.broadcast %cst_12 : f32 to vector<8x8xf32>
    %34 = arith.mulf %33, %32 : vector<8x8xf32>
    %cst_13 = arith.constant dense<0xFF800000> : vector<8xf32>
    %35 = vector.multi_reduction <maximumf>, %34, %cst_13 [1] : vector<8x8xf32> to vector<8xf32>
    %36 = vector.shape_cast %35 : vector<8xf32> to vector<8x1xf32>
    %37 = vector.broadcast %36 : vector<8x1xf32> to vector<8x8xf32>
    %38 = arith.subf %34, %37 : vector<8x8xf32>
    %39 = math.exp %38 : vector<8x8xf32>
    %cst_14 = arith.constant dense<0.000000e+00> : vector<8xf32>
    %40 = vector.multi_reduction <add>, %39, %cst_14 [1] : vector<8x8xf32> to vector<8xf32>
    %41 = vector.shape_cast %40 : vector<8xf32> to vector<8x1xf32>
    %42 = math.log %41 : vector<8x1xf32>
    %43 = arith.addf %42, %36 : vector<8x1xf32>
    %cst_15 = arith.constant 0.000000e+00 : f32
    %44 = vector.broadcast %cst_15 : f32 to vector<8x8xf32>
    %45 = arith.select %29, %34, %44 : vector<8x8xi1>, vector<8x8xf32>
    %cst_16 = arith.constant dense<0.000000e+00> : vector<8xf32>
    %46 = vector.multi_reduction <add>, %45, %cst_16 [1] : vector<8x8xf32> to vector<8xf32>
    %47 = vector.shape_cast %46 : vector<8xf32> to vector<8x1xf32>
    %48 = arith.subf %43, %47 : vector<8x1xf32>
    %cst_17 = arith.constant dense<0.000000e+00> : vector<1xf32>
    %49 = vector.multi_reduction <add>, %48, %cst_17 [0] : vector<8x1xf32> to vector<1xf32>
    %50 = vector.shape_cast %49 : vector<1xf32> to vector<1x1xf32>
    %cst_18 = arith.constant 1.250000e-01 : f32
    %51 = vector.broadcast %cst_18 : f32 to vector<1x1xf32>
    %52 = arith.mulf %50, %51 : vector<1x1xf32>
    %cst_19 = arith.constant 0.000000e+00 : f32
    %53 = vector.broadcast %cst_19 : f32 to vector<1x1xf32>
    %54 = vector.extract_strided_slice %9 {offsets = [0, 0], sizes = [32, 8], strides = [1, 1]} : vector<32x16xf32> to vector<32x8xf32>
    %55 = vector.extract_strided_slice %9 {offsets = [0, 8], sizes = [32, 8], strides = [1, 1]} : vector<32x16xf32> to vector<32x8xf32>
    %56 = arith.mulf %54, %55 : vector<32x8xf32>
    %cst_20 = arith.constant dense<0.000000e+00> : vector<8xf32>
    %57 = vector.multi_reduction <add>, %56, %cst_20 [0] : vector<32x8xf32> to vector<8xf32>
    %58 = vector.shape_cast %57 : vector<8xf32> to vector<1x8xf32>
    %cst_21 = arith.constant 2.000000e+00 : f32
    %59 = vector.broadcast %cst_21 : f32 to vector<1x8xf32>
    %60 = arith.mulf %59, %58 : vector<1x8xf32>
    %cst_22 = arith.constant 2.000010e+00 : f32
    %61 = vector.broadcast %cst_22 : f32 to vector<1x8xf32>
    %62 = arith.subf %61, %60 : vector<1x8xf32>
    %cst_23 = arith.constant 0.000000e+00 : f32
    %63 = vector.broadcast %cst_23 : f32 to vector<1x8xf32>
    %64 = arith.maximumf %62, %63 : vector<1x8xf32>
    %65 = math.sqrt %64 : vector<1x8xf32>
    %cst_24 = arith.constant dense<0.000000e+00> : vector<1xf32>
    %66 = vector.multi_reduction <add>, %65, %cst_24 [1] : vector<1x8xf32> to vector<1xf32>
    %67 = vector.shape_cast %66 : vector<1xf32> to vector<1x1xf32>
    %68 = arith.addf %53, %67 : vector<1x1xf32>
    %cst_25 = arith.constant 6.250000e-02 : f32
    %69 = vector.broadcast %cst_25 : f32 to vector<1x1xf32>
    %70 = arith.mulf %68, %69 : vector<1x1xf32>
    %cst_26 = arith.constant 2.000000e-01 : f32
    %71 = vector.broadcast %cst_26 : f32 to vector<1x1xf32>
    %72 = arith.mulf %71, %70 : vector<1x1xf32>
    %73 = arith.addf %52, %72 : vector<1x1xf32>
    %c0_27 = arith.constant 0 : index
    %c0_28 = arith.constant 0 : index
    %74 = vector.load %arg3[%c0_27, %c0_28] : memref<1x1xf32, #tpu.memory_space<vmem>>, vector<1x1xf32>
    tpu.vector_store %arg3[%c0_27, %c0_28], %73 {strides = array<i32>} : memref<1x1xf32, #tpu.memory_space<vmem>>, vector<1x1xf32>,
    return
  }
}

</mosaic_0001>

<llo_original>
// kernel: tpu_custom_call.1
$region0: #{tpu_custom_call.1}
  #allocation0 [shape = 'u32[]', space=smem, size = 0x4, offset = 0x4, fixed_abs, tag = 'smem constant byte address 0x4 - core index']
  #allocation1 [shape = 'u32[144,128]{1,0:T(1,128)}', space=vmem, size = 0x12000, scoped, tag = 'internal scratch']
  %s0 = inlined_call_operand.vmem [shape: f32[8,32], index: 0, kind: input, shape index: {}]
  %s1 = inlined_call_operand.vmem [shape: f32[32,16], index: 1, kind: input, shape index: {}]
  %s2 = inlined_call_operand.vmem [shape: s32[8,1], index: 2, kind: input, shape index: {}]
  %s3 = inlined_call_operand.hbm [shape: f32[1,1], index: 3, kind: output, shape index: {}]
  %s4 = sld [smem:[#allocation0]]
  $region22: #{tpu_custom_call.1} parent=0
    _
  %s6 = ssub.s32 1, %s4
  %s7 = scalar_select 0, %s6, %s4
  $region1: #{tpu_custom_call.1} parent=0
    #allocation2 [shape = 'u8[512]{0}', space=vmem, size = 0x400, scoped, tag = 'output window, operand 0, single buffered']
    #allocation3 [shape = 's32[1]{0}', space=sflag, size = 0x4, scoped, tag = 'scoped memory for tpu_custom_call.1']
    %8 = vsyncpa [#allocation3], 0
    // Predicated region
    $region2: #{tpu_custom_call.1} parent=1 // pred_check
      _
    $region3: #{tpu_custom_call.1} parent=1 // pred_check_branch
      %10 = sbr.rel (0) target = $region5
    $region4: #{tpu_custom_call.1} parent=1 // pred_region
      _
    $region5: #{tpu_custom_call.1} parent=1 // pred_fallthru
      _
    // Predicated region
    $region6: #{tpu_custom_call.1} parent=1 // pred_check
      _
    $region7: #{tpu_custom_call.1} parent=1 // pred_check_branch
      %12 = sbr.rel (0) target = $region9
    $region8: #{tpu_custom_call.1} parent=1 // pred_region
      _
    $region9: #{tpu_custom_call.1} parent=1 // pred_fallthru
      _
    // Predicated region
    $region10: #{tpu_custom_call.1} parent=1 // pred_check
      _
    $region11: #{tpu_custom_call.1} parent=1 // pred_check_branch
      %14 = sbr.rel (0) target = $region13
    $region12: #{tpu_custom_call.1} parent=1 // pred_region
      _
    $region13: #{tpu_custom_call.1} parent=1 // pred_fallthru
      _
    %v15 = vld [vmem:[%s0] sm:$0xff]
    %v16 = vld [vmem:[%s1] sm:$0xff]
    %v17 = vld [vmem:[%s1 + $0x8] sm:$0xff]
    %v18 = vld [vmem:[%s1 + $0x10] sm:$0xff]
    %v19 = vld [vmem:[%s1 + $0x18] sm:$0xff]
    %v20 = vmul.f32 %v16, %v16
    %v21 = vmul.f32 %v17, %v17
    %v22 = vmul.f32 %v18, %v18
    %v23 = vmul.f32 %v19, %v19
    %vm24 = vcmask 130048
    %v25 = vsel %vm24, %v20, 0.0
    %v26 = vsel %vm24, %v21, 0.0
    %v27 = vadd.f32 %v25, %v26
    %v28 = vsel %vm24, %v22, 0.0
    %v29 = vadd.f32 %v27, %v28
    %v30 = vsel %vm24, %v23, 0.0
    %v31 = vadd.f32 %v29, %v30
    %v32 = vrot.slane %v31, 4
    %v33 = vadd.f32 %v31, %v32
    %v34 = vrot.slane %v33, 2
    %v35 = vadd.f32 %v33, %v34
    %v36 = vrot.slane %v35, 1
    %v37 = vadd.f32 %v35, %v36
    %v38 = vmax.f32 %v37, 1e-24
    %v39 = vrsqrt.pop %v38
    %v40 = vmul.f32 %v16, %v39
    %v41 = vmul.f32 %v17, %v39
    %v42 = vmul.f32 %v18, %v39
    %v43 = vmul.f32 %v19, %v39
    %vm44 = vcmask 261120
    %v46 = vsel %vm44, %v15, 0
    %48 = vmatprep.subr.mxu0 0.0
    %49 = vmatpush1.msra.mxu0 %v40
    %50 = vmatprep.subr.mxu0 0.0
    %51 = vmatpush1.msra.mxu0 %v41
    %52 = vmatprep.subr.mxu0 0.0
    %53 = vmatpush1.msra.mxu0 %v42
    %54 = vmatprep.subr.mxu0 0.0
    %55 = vmatpush1.msra.mxu0 %v43
    %56 = vmatprep.subr.mxu0 0.0
    %57 = vmatpush1.msra.mxu0 0.0
    %58 = vmatprep.subr.mxu0 0.0
    %59 = vmatpush1.msra.mxu0 0.0
    %60 = vmatprep.subr.mxu0 0.0
    %61 = vmatpush1.msra.mxu0 0.0
    %62 = vmatprep.subr.mxu0 0.0
    %63 = vmatpush1.msra.mxu0 0.0
    %64 = vmatprep.subr.mxu0 0.0
    %65 = vmatpush1.msra.mxu0 0.0
    %66 = vmatprep.subr.mxu0 0.0
    %67 = vmatpush1.msra.mxu0 0.0
    %68 = vmatprep.subr.mxu0 0.0
    %69 = vmatpush1.msra.mxu0 0.0
    %70 = vmatprep.subr.mxu0 0.0
    %71 = vmatpush1.msra.mxu0 0.0
    %72 = vmatprep.subr.mxu0 0.0
    %73 = vmatpush1.msra.mxu0 0.0
    %74 = vmatprep.subr.mxu0 0.0
    %75 = vmatpush1.msra.mxu0 0.0
    %76 = vmatprep.subr.mxu0 0.0
    %77 = vmatpush1.msra.mxu0 0.0
    %78 = vmatprep.subr.mxu0 0.0
    %79 = vmatpush1.msra.mxu0 0.0
    %80 = vmatprep.subr.mxu0 0.0
    %81 = vmatpush1.msra.mxu0 0.0
    %82 = vmatprep.subr.mxu0 0.0
    %83 = vmatpush1.msra.mxu0 0.0
    %84 = vmatprep.subr.mxu0 0.0
    %85 = vmatpush1.msra.mxu0 0.0
    %86 = vmatprep.subr.mxu0 0.0
    %87 = vmatpush1.msra.mxu0 0.0
    %88 = vmatprep.subr.mxu0 0.0
    %89 = vmatpush1.msra.mxu0 0.0
    %90 = vmatprep.subr.mxu0 0.0
    %91 = vmatpush1.msra.mxu0 0.0
    %92 = vmatprep.subr.mxu0 0.0
    %93 = vmatpush1.msra.mxu0 0.0
    %94 = vmatprep.subr.mxu0 0.0
    %95 = vmatpush1.msra.mxu0 0.0
    %96 = vmatprep.subr.mxu0 0.0
    %97 = vmatpush1.msra.mxu0 0.0
    %98 = vmatprep.subr.mxu0 0.0
    %99 = vmatpush1.msra.mxu0 0.0
    %100 = vmatprep.subr.mxu0 0.0
    %101 = vmatpush1.msra.mxu0 0.0
    %102 = vmatprep.subr.mxu0 0.0
    %103 = vmatpush1.msra.mxu0 0.0
    %104 = vmatprep.subr.mxu0 0.0
    %105 = vmatpush1.msra.mxu0 0.0
    %106 = vmatprep.subr.mxu0 0.0
    %107 = vmatpush1.msra.mxu0 0.0
    %108 = vmatprep.subr.mxu0 0.0
    %109 = vmatpush1.msra.mxu0 0.0
    %110 = vmatprep.subr.mxu0 0.0
    %111 = vmatpush1.msra.mxu0 0.0
    %112 = vmatprep.mubr.f32.mxu0 0.0
    %113 = vmatmul.mubr.f32.gmra.mrb[0].mxu0 %v46
    %v114 = vpop.f32.mrb[0].mxu0
    %v115 = vadd.f32 0.0, %v114
    %v116 = vpop.f32.mrb[0].mxu0
    %117 = vdwg.mxu0
    %119 = vrot.lane.b32.xlu0 %v115, 120
    %v120 = vpop.permute.xlu0 %119
    %v122 = vsub.f32 %v115, %v120
    %v123 = vmul.f32 %v122, -10.0
    %v124 = vmul.f32 %v123, 1.442695
    %v125 = vpow.pop %v124
    %v126 = vadd.f32 %v125, 1.0
    %v127 = vrcp.pop %v126
    %v128 = vmul.f32 1.0, %v127
    %v129 = vmul.f32 %v128, %v115
    %v130 = vsub.f32 1.0, %v128
    %v131 = vmul.f32 %v130, %v120
    %v132 = vadd.f32 %v129, %v131
    %v133 = vld [vmem:[%s2] sm:$0xff]
    %v134 = vlaneseq
    %v135 = vand.u32 %v134, 127
    %136 = vset.pattern.permute.xlu0 0
    %137 = vperm.xlu0 %136, %v133
    %v138 = vpop.permute.xlu0 %137
    %vm139 = vcmp.eq.s32.totalorder %v135, %v138
    %v140 = vsub.f32 %v132, 0.01
    %v141 = vsel %vm139, %v140, %v132
    %v142 = vmul.f32 %v141, 20.0
    %vm143 = vcmask 64512
    %v144 = vsel %vm143, %v142, -inf
    %145 = vmax.xlane.f32.xlu0 %v144
    %v146 = vpop.xlane.xlu0 %145
    %v147 = vsub.f32 %v142, %v146
    %v148 = vmul.f32 %v147, 1.442695
    %v149 = vpow.pop %v148
    %v150 = vsel %vm143, %v149, 0.0
    %151 = vadd.xlane.f32.xlu0 %v150
    %v152 = vpop.xlane.xlu0 %151
    %v153 = vlog2.pop %v152
    %v154 = vmul.f32 %v153, 0.6931472
    %v155 = vadd.f32 %v154, %v146
    %v156 = vsel %vm139, %v142, 0.0
    %v157 = vsel %vm143, %v156, 0.0
    %158 = vadd.xlane.f32.xlu0 %v157
    %v159 = vpop.xlane.xlu0 %158
    %v160 = vsub.f32 %v155, %v159
    %v161 = vrot.slane %v160, 4
    %v162 = vadd.f32 %v160, %v161
    %v163 = vrot.slane %v162, 2
    %v164 = vadd.f32 %v162, %v163
    %v165 = vrot.slane %v164, 1
    %v166 = vadd.f32 %v164, %v165
    %v167 = vmul.f32 %v166, 0.125
    %172 = vrot.lane.b32.xlu0 %v40, 120
    %v173 = vpop.permute.xlu0 %172
    %174 = vrot.lane.b32.xlu0 %v41, 120
    %v175 = vpop.permute.xlu0 %174
    %176 = vrot.lane.b32.xlu0 %v42, 120
    %v177 = vpop.permute.xlu0 %176
    %178 = vrot.lane.b32.xlu0 %v43, 120
    %v179 = vpop.permute.xlu0 %178
    %v184 = vmul.f32 %v40, %v173
    %v185 = vmul.f32 %v41, %v175
    %v186 = vmul.f32 %v42, %v177
    %v187 = vmul.f32 %v43, %v179
    %v188 = vsel %vm143, %v184, 0.0
    %v189 = vsel %vm143, %v185, 0.0
    %v190 = vadd.f32 %v188, %v189
    %v191 = vsel %vm143, %v186, 0.0
    %v192 = vadd.f32 %v190, %v191
    %v193 = vsel %vm143, %v187, 0.0
    %v194 = vadd.f32 %v192, %v193
    %v195 = vrot.slane %v194, 4
    %v196 = vadd.f32 %v194, %v195
    %v197 = vrot.slane %v196, 2
    %v198 = vadd.f32 %v196, %v197
    %v199 = vrot.slane %v198, 1
    %v200 = vadd.f32 %v198, %v199
    %v201 = vmul.f32 %v200, 2.0
    %v202 = vsub.f32 2.00001, %v201
    %v203 = vmax.f32 %v202, 0.0
    %v204 = vrsqrt.pop %v203
    %v205 = vmul.f32 %v203, %v204
    %vm206 = vcmp.eq.f32.partialorder %v203, inf
    %v207 = vsel %vm206, %v203, %v205
    %vm208 = vcmp.eq.f32.partialorder %v203, 0.0
    %v209 = vand.u32 %v203, 2147483648
    %v210 = vsel %vm208, %v209, %v207
    %v211 = vsel %vm143, %v210, 0.0
    %212 = vadd.xlane.f32.xlu0 %v211
    %v213 = vpop.xlane.xlu0 %212
    %v214 = vadd.f32 %v213, 0.0
    %v215 = vmul.f32 %v214, 0.0625
    %v216 = vmul.f32 %v215, 0.2
    %v217 = vadd.f32 %v167, %v216
    %vm218 = vcmask 0
    %219 = vst.msk [vmem:[#allocation2] sm:$0x1] %vm218, %v217
    // Predicated region
    $region14: #{tpu_custom_call.1} parent=1 // pred_check
      _
    $region15: #{tpu_custom_call.1} parent=1 // pred_check_branch
      %221 = sbr.rel (0) target = $region17
    $region16: #{tpu_custom_call.1} parent=1 // pred_region
      %s223 = ssub.s32 16, 16
      %224 = vsyncadd [#allocation3], %s223
      %s226 = sshll.u32 [#allocation2], 4
      %s227 = int_to_ptr.vmem [resolvable:$true] %s226
      %229 = dma.vmem_to_hbm [thread:$0]  %s227, 16, %s3, [#allocation3]
    $region17: #{tpu_custom_call.1} parent=1 // pred_fallthru
      _
    // Predicated region
    $region18: #{tpu_custom_call.1} parent=1 // pred_check
      _
    $region19: #{tpu_custom_call.1} parent=1 // pred_check_branch
      %231 = sbr.rel (0) target = $region21
    $region20: #{tpu_custom_call.1} parent=1 // pred_region
      %232 = dma.done [#allocation3], 16
    $region21: #{tpu_custom_call.1} parent=1 // pred_fallthru
      _
    %233 = vsyncpa [#allocation3], 1

</llo_original>
